<compile_context>
chip_gen: v6e
topology: v6e:2x2x1
jax: 0.10.0
libtpu: 0.0.40
codegen_flags: <defaults>
</compile_context>

<pallas_src>
import jax
import jax.numpy as jnp
from jax import lax
from jax.experimental import pallas as pl
from jax.experimental.pallas import tpu as pltpu


def _make_skipgram_kernel(TBC, V):
    """Kernel for one batch tile: TBC = batch_tile * C flattened (row, ctx) pairs."""

    def kernel(u_idx_ref, c_idx_ref,   # (TBC, 1) int32 index tiles (VMEM)
               u_tab_ref, v_tab_ref,   # (V, D) float32 tables, VMEM-resident
               out_ref):               # (TBC, 1) float32 scores
        # One-hot gather on the MXU: onehot (TBC, V) @ table (V, D) -> (TBC, D).
        iota = lax.broadcasted_iota(jnp.int32, (TBC, V), 1)
        onehot_u = (u_idx_ref[...] == iota).astype(jnp.float32)
        onehot_c = (c_idx_ref[...] == iota).astype(jnp.float32)
        emb_u = jnp.dot(onehot_u, u_tab_ref[...], preferred_element_type=jnp.float32)
        emb_v = jnp.dot(onehot_c, v_tab_ref[...], preferred_element_type=jnp.float32)
        # score[i] = <emb_v[i], emb_u[i]>  (== torch.bmm(emb_v, emb_u[..., None]))
        out_ref[...] = jnp.sum(emb_u * emb_v, axis=-1, keepdims=True)

    return kernel


def _pick_batch_tile(bs, batch_tile):
    """Largest tile <= batch_tile that divides bs, is a multiple of 8, and
    (preferably) leaves an EVEN grid so v7x megacore gets both TensorCores."""
    candidates = [t for t in range(8, min(bs, batch_tile) + 1, 8) if bs % t == 0]
    even = [t for t in candidates if (bs // t) % 2 == 0]
    if even:
        return max(even)
    if candidates:
        return max(candidates)
    return bs  # tiny / odd batch: single block


def skipgram_forward(u_table, v_table, pos_u, pos_v, neg_v, *, batch_tile=256):
    """Pallas-backed SkipGram.forward with VMEM-resident tables + MXU gather.

    u_table, v_table : (vocab, D) float32 embedding tables
    pos_u : (bs,)     int center-word indices
    pos_v : (bs, P)   int positive context indices
    neg_v : (bs, N)   int negative-sample indices
    returns (pos_s, neg_s) with shapes (bs, P), (bs, N), float32
    """
    bs = pos_u.shape[0]
    P = pos_v.shape[1]
    N = neg_v.shape[1]
    C = P + N
    V, D = u_table.shape

    TB = _pick_batch_tile(bs, batch_tile)
    assert bs % TB == 0
    TBC = TB * C

    # VMEM-residency budget (both tables, conservatively double-buffered once).
    table_bytes = 2 * V * D * 4
    assert table_bytes * 2 <= (24 << 20), (
        "embedding tables too large for the VMEM-resident path")
    stream_bytes = 2 * (2 * TBC * 4) + 2 * (TBC * 4)   # double-buffered idx + out tiles
    vmem_limit = min(max(2 * (table_bytes * 2 + stream_bytes) + (1 << 20), 16 << 20),
                     32 << 20)

    # Flatten indices to (bs*C, 1): positives + negatives become one context
    # stream; the center index is repeated per context slot so the kernel stays
    # purely 2-D (no in-kernel reshapes / 3-D relayouts).
    pos_u = pos_u.astype(jnp.int32)
    ctx_idx = jnp.concatenate([pos_v, neg_v], axis=1).astype(jnp.int32)       # (bs, C)
    ctx_flat = ctx_idx.reshape(bs * C, 1)                                     # (bs*C, 1)
    u_rep = jnp.broadcast_to(pos_u[:, None], (bs, C)).reshape(bs * C, 1)      # (bs*C, 1)

    kernel = _make_skipgram_kernel(TBC, V)

    scores = pl.pallas_call(
        kernel,
        out_shape=jax.ShapeDtypeStruct((bs * C, 1), jnp.float32),
        grid=(bs // TB,),
        in_specs=[
            pl.BlockSpec((TBC, 1), lambda b: (b, 0)),       # repeated center idx
            pl.BlockSpec((TBC, 1), lambda b: (b, 0)),       # context idx
            pl.BlockSpec((V, D), lambda b: (0, 0)),         # u table: VMEM-resident
            pl.BlockSpec((V, D), lambda b: (0, 0)),         # v table: VMEM-resident
        ],
        out_specs=pl.BlockSpec((TBC, 1), lambda b: (b, 0)),
        compiler_params=pltpu.CompilerParams(
            # Batch tiles are independent -> shard across TCs (2 on v7x).
            dimension_semantics=("parallel",),
            vmem_limit_bytes=vmem_limit,
        ),
    )(u_rep, ctx_flat, u_table.astype(jnp.float32), v_table.astype(jnp.float32))

    scores = scores.reshape(bs, C)
    return scores[:, :P], scores[:, P:]


if __name__ == "__main__":
    vocab_size = 64
    emb_dim = 32     # D
    bs = 16          # batch (two batch tiles of 8 -> exercises grid + megacore)
    P = 1            # positive context words per center word
    N = 5            # negative samples per center word

    key = jax.random.PRNGKey(0)
    k_u, k_v, k_pu, k_pv, k_nv = jax.random.split(key, 5)

    std = emb_dim ** (-0.25)
    u_table = std * jax.random.normal(k_u, (vocab_size, emb_dim), dtype=jnp.float32)
    v_table = std * jax.random.normal(k_v, (vocab_size, emb_dim), dtype=jnp.float32)

    pos_u = jax.random.randint(k_pu, (bs,), 0, vocab_size, dtype=jnp.int32)
    pos_v = jax.random.randint(k_pv, (bs, P), 0, vocab_size, dtype=jnp.int32)
    neg_v = jax.random.randint(k_nv, (bs, N), 0, vocab_size, dtype=jnp.int32)

    pos_s, neg_s = skipgram_forward(u_table, v_table, pos_u, pos_v, neg_v)
    jax.block_until_ready((pos_s, neg_s))

    # Reference check (pure JAX, mirrors torch.bmm semantics).
    eu = jnp.take(u_table, pos_u, axis=0)
    ref_pos = jnp.einsum("bpd,bd->bp", jnp.take(v_table, pos_v, axis=0), eu)
    ref_neg = jnp.einsum("bnd,bd->bn", jnp.take(v_table, neg_v, axis=0), eu)
    assert pos_s.shape == (bs, P) and neg_s.shape == (bs, N)
    assert jnp.allclose(pos_s, ref_pos, atol=1e-5), "pos_s mismatch"
    assert jnp.allclose(neg_s, ref_neg, atol=1e-5), "neg_s mismatch"

    print("KERNEL_OK")
</pallas_src>

<mosaic_0001>
module attributes {stable_mosaic.version = 11 : i64} {
  func.func @kernel(%arg0: i32, %arg1: memref<48x1xi32, #tpu.memory_space<vmem>>, %arg2: memref<48x1xi32, #tpu.memory_space<vmem>>, %arg3: memref<64x32xf32, #tpu.memory_space<vmem>>, %arg4: memref<64x32xf32, #tpu.memory_space<vmem>>, %arg5: memref<48x1xf32, #tpu.memory_space<vmem>>) attributes {dimension_semantics = [#tpu.dimension_semantics<parallel>], iteration_bounds = array<i64: 2>, scalar_prefetch = 0 : i64, scratch_operands = 0 : i64, tpu.core_type = #tpu.core_type<tc>, window_params = [{transform_indices = @transform_0, window_bounds = array<i64: 48, 1>}, {transform_indices = @transform_1, window_bounds = array<i64: 48, 1>}, {pipeline_mode = #tpu.pipeline_mode<synchronous>, transform_indices = @transform_2, window_bounds = array<i64: 64, 32>}, {pipeline_mode = #tpu.pipeline_mode<synchronous>, transform_indices = @transform_3, window_bounds = array<i64: 64, 32>}, {transform_indices = @transform_4, window_bounds = array<i64: 48, 1>}]} {
    %0 = tpu.iota {dimensions = array<i32: 1>} : vector<48x64xi32>
    %c0 = arith.constant 0 : index
    %c0_0 = arith.constant 0 : index
    %1 = vector.load %arg1[%c0, %c0_0] : memref<48x1xi32, #tpu.memory_space<vmem>>, vector<48x1xi32>
    %2 = vector.broadcast %1 : vector<48x1xi32> to vector<48x64xi32>
    %3 = arith.cmpi eq, %2, %0 : vector<48x64xi32>
    %4 = arith.extui %3 : vector<48x64xi1> to vector<48x64xi32>
    %5 = arith.sitofp %4 : vector<48x64xi32> to vector<48x64xf32>
    %c0_1 = arith.constant 0 : index
    %c0_2 = arith.constant 0 : index
    %6 = vector.load %arg2[%c0_1, %c0_2] : memref<48x1xi32, #tpu.memory_space<vmem>>, vector<48x1xi32>
    %7 = vector.broadcast %6 : vector<48x1xi32> to vector<48x64xi32>
    %8 = arith.cmpi eq, %7, %0 : vector<48x64xi32>
    %9 = arith.extui %8 : vector<48x64xi1> to vector<48x64xi32>
    %10 = arith.sitofp %9 : vector<48x64xi32> to vector<48x64xf32>
    %c0_3 = arith.constant 0 : index
    %c0_4 = arith.constant 0 : index
    %11 = vector.load %arg3[%c0_3, %c0_4] : memref<64x32xf32, #tpu.memory_space<vmem>>, vector<64x32xf32>
    %cst = arith.constant dense<0.000000e+00> : vector<48x32xf32>
    %12 = tpu.matmul %5, %11, %cst {dimension_numbers = #tpu.dot_dimension_numbers<[1], [0], [0], [1], [0, 0, 1, 1], [], []>} : vector<48x64xf32>, vector<64x32xf32>, vector<48x32xf32> -> vector<48x32xf32>
    %c0_5 = arith.constant 0 : index
    %c0_6 = arith.constant 0 : index
    %13 = vector.load %arg4[%c0_5, %c0_6] : memref<64x32xf32, #tpu.memory_space<vmem>>, vector<64x32xf32>
    %cst_7 = arith.constant dense<0.000000e+00> : vector<48x32xf32>
    %14 = tpu.matmul %10, %13, %cst_7 {dimension_numbers = #tpu.dot_dimension_numbers<[1], [0], [0], [1], [0, 0, 1, 1], [], []>} : vector<48x64xf32>, vector<64x32xf32>, vector<48x32xf32> -> vector<48x32xf32>
    %15 = arith.mulf %12, %14 : vector<48x32xf32>
    %cst_8 = arith.constant dense<0.000000e+00> : vector<48xf32>
    %16 = vector.multi_reduction <add>, %15, %cst_8 [1] : vector<48x32xf32> to vector<48xf32>
    %17 = vector.shape_cast %16 : vector<48xf32> to vector<48x1xf32>
    %c0_9 = arith.constant 0 : index
    %c0_10 = arith.constant 0 : index
    %18 = vector.load %arg5[%c0_9, %c0_10] : memref<48x1xf32, #tpu.memory_space<vmem>>, vector<48x1xf32>
    tpu.vector_store %arg5[%c0_9, %c0_10], %17 {strides = array<i32>} : memref<48x1xf32, #tpu.memory_space<vmem>>, vector<48x1xf32>,
    return
  }
  func.func @transform_0(%arg0: i32) -> (i32, i32) {
    %c0_i32 = arith.constant 0 : i32
    %c0_i32_0 = arith.constant 0 : i32
    return %arg0, %c0_i32 : i32, i32
  }
  func.func @transform_1(%arg0: i32) -> (i32, i32) {
    %c0_i32 = arith.constant 0 : i32
    %c0_i32_0 = arith.constant 0 : i32
    return %arg0, %c0_i32 : i32, i32
  }
  func.func @transform_2(%arg0: i32) -> (i32, i32) {
    %c0_i32 = arith.constant 0 : i32
    %c0_i32_0 = arith.constant 0 : i32
    %c0_i32_1 = arith.constant 0 : i32
    return %c0_i32, %c0_i32_0 : i32, i32
  }
  func.func @transform_3(%arg0: i32) -> (i32, i32) {
    %c0_i32 = arith.constant 0 : i32
    %c0_i32_0 = arith.constant 0 : i32
    %c0_i32_1 = arith.constant 0 : i32
    return %c0_i32, %c0_i32_0 : i32, i32
  }
  func.func @transform_4(%arg0: i32) -> (i32, i32) {
    %c0_i32 = arith.constant 0 : i32
    %c0_i32_0 = arith.constant 0 : i32
    return %arg0, %c0_i32 : i32, i32
  }
}

</mosaic_0001>

<llo_original>
// kernel: tpu_custom_call.1
$region0: #{tpu_custom_call.1}
  #allocation0 [shape = 'u32[]', space=smem, size = 0x4, offset = 0x4, fixed_abs, tag = 'smem constant byte address 0x4 - core index']
  #allocation1 [shape = 'u32[144,128]{1,0:T(1,128)}', space=vmem, size = 0x12000, scoped, tag = 'internal scratch']
  %s0 = inlined_call_operand.vmem [shape: s32[96,1], index: 0, kind: input, shape index: {}]
  %s1 = inlined_call_operand.vmem [shape: s32[96,1], index: 1, kind: input, shape index: {}]
  %s2 = inlined_call_operand.vmem [shape: f32[64,32], index: 2, kind: input, shape index: {}]
  %s3 = inlined_call_operand.vmem [shape: f32[64,32], index: 3, kind: input, shape index: {}]
  %s4 = inlined_call_operand.vmem [shape: f32[96,1], index: 4, kind: output, shape index: {}]
  %s5 = sld [smem:[#allocation0]]
  $region49: #{tpu_custom_call.1} parent=0
    _
  %s7 = ssub.s32 1, %s5
  %s8 = scalar_select 0, %s7, %s5
  loop: start=0, step=1, limit=4
  $region2: #{tpu_custom_call.1} parent=0 // loop_pre_header
    _
  $region3: #{tpu_custom_call.1} parent=0 // loop_header
    %s10 = sphi 0, %s14
    %p11 = scmp.ge.s32.totalorder %s10, 4
    %s20 = sphi 0, %s22
    %s23 = sphi 0, %s20
    %s24 = sphi 0, %s23
    %s40 = sphi 0, %s24
    %s46 = sphi 0, %s48
    %s49 = sphi 0, %s46
    %s50 = sphi 0, %s49
    %s66 = sphi 0, %s50
    %s70 = sphi 0, %s70
    %s72 = sphi 0, %s70
    %s73 = sphi 0, %s72
    %s87 = sphi 0, %s73
    %s91 = sphi 0, %s91
    %s93 = sphi 0, %s91
    %s94 = sphi 0, %s93
    %s108 = sphi 0, %s94
    %s114 = sphi 0, %s116
    %s117 = sphi 0, %s114
    %s118 = sphi 0, %s117
    %s134 = sphi 0, %s118
  $region4: #{tpu_custom_call.1} parent=0 // loop_header_branch
    %13 = sbr.rel (%p11) target = $region8
  $region5: #{tpu_custom_call.1} parent=0 // loop_body
    %s15 = ssub.s32 %s10, 1
    %s16 = ssub.s32 %s10, 2
    %s17 = sadd.s32 %s10, 1
    %s18 = ssub.s32 %s10, %s17
    %p19 = scmp.eq.s32.totalorder %s18, 0
    %s21 = sadd.s32 %s20, 1
    %s22 = scalar_select %p19, %s20, %s21
    %p25 = pneg %p19
    %p26 = scmp.eq.s32.totalorder %s10, 1
    %p27 = por %p25, %p26
    %p28 = scmp.ne.s32.totalorder %s20, %s23
    %p29 = scmp.eq.s32.totalorder %s10, 0
    %p30 = por %p28, %p29
    %p31 = scmp.ne.s32.totalorder %s20, %s23
    %p32 = scmp.eq.s32.totalorder %s15, 1
    %p33 = por %p31, %p32
    %p34 = scmp.ne.s32.totalorder %s23, %s24
    %p35 = scmp.eq.s32.totalorder %s15, 0
    %p36 = por %p34, %p35
    %p37 = scmp.ne.s32.totalorder %s23, %s24
    %p38 = scmp.eq.s32.totalorder %s16, 1
    %p39 = por %p37, %p38
    %p41 = scmp.ne.s32.totalorder %s24, %s40
    %p42 = scmp.eq.s32.totalorder %s16, 0
    %p43 = por %p41, %p42
    %s44 = ssub.s32 %s10, %s17
    %p45 = scmp.eq.s32.totalorder %s44, 0
    %s47 = sadd.s32 %s46, 1
    %s48 = scalar_select %p45, %s46, %s47
    %p51 = pneg %p45
    %p52 = scmp.eq.s32.totalorder %s10, 1
    %p53 = por %p51, %p52
    %p54 = scmp.ne.s32.totalorder %s46, %s49
    %p55 = scmp.eq.s32.totalorder %s10, 0
    %p56 = por %p54, %p55
    %p57 = scmp.ne.s32.totalorder %s46, %s49
    %p58 = scmp.eq.s32.totalorder %s15, 1
    %p59 = por %p57, %p58
    %p60 = scmp.ne.s32.totalorder %s49, %s50
    %p61 = scmp.eq.s32.totalorder %s15, 0
    %p62 = por %p60, %p61
    %p63 = scmp.ne.s32.totalorder %s49, %s50
    %p64 = scmp.eq.s32.totalorder %s16, 1
    %p65 = por %p63, %p64
    %p67 = scmp.ne.s32.totalorder %s50, %s66
    %p68 = scmp.eq.s32.totalorder %s16, 0
    %p69 = por %p67, %p68
    %s71 = sadd.s32 %s70, 1
    %p74 = scmp.eq.s32.totalorder %s10, 1
    %p75 = scmp.ne.s32.totalorder %s70, %s72
    %p76 = scmp.eq.s32.totalorder %s10, 0
    %p77 = por %p75, %p76
    %p78 = scmp.ne.s32.totalorder %s70, %s72
    %p79 = scmp.eq.s32.totalorder %s15, 1
    %p80 = por %p78, %p79
    %p81 = scmp.ne.s32.totalorder %s72, %s73
    %p82 = scmp.eq.s32.totalorder %s15, 0
    %p83 = por %p81, %p82
    %p84 = scmp.ne.s32.totalorder %s72, %s73
    %p85 = scmp.eq.s32.totalorder %s16, 1
    %p86 = por %p84, %p85
    %p88 = scmp.ne.s32.totalorder %s73, %s87
    %p89 = scmp.eq.s32.totalorder %s16, 0
    %p90 = por %p88, %p89
    %s92 = sadd.s32 %s91, 1
    %p95 = scmp.eq.s32.totalorder %s10, 1
    %p96 = scmp.ne.s32.totalorder %s91, %s93
    %p97 = scmp.eq.s32.totalorder %s10, 0
    %p98 = por %p96, %p97
    %p99 = scmp.ne.s32.totalorder %s91, %s93
    %p100 = scmp.eq.s32.totalorder %s15, 1
    %p101 = por %p99, %p100
    %p102 = scmp.ne.s32.totalorder %s93, %s94
    %p103 = scmp.eq.s32.totalorder %s15, 0
    %p104 = por %p102, %p103
    %p105 = scmp.ne.s32.totalorder %s93, %s94
    %p106 = scmp.eq.s32.totalorder %s16, 1
    %p107 = por %p105, %p106
    %p109 = scmp.ne.s32.totalorder %s94, %s108
    %p110 = scmp.eq.s32.totalorder %s16, 0
    %p111 = por %p109, %p110
    %s112 = ssub.s32 %s10, %s17
    %p113 = scmp.eq.s32.totalorder %s112, 0
    %s115 = sadd.s32 %s114, 1
    %s116 = scalar_select %p113, %s114, %s115
    %p119 = pneg %p113
    %p120 = scmp.eq.s32.totalorder %s10, 1
    %p121 = por %p119, %p120
    %p122 = scmp.ne.s32.totalorder %s114, %s117
    %p123 = scmp.eq.s32.totalorder %s10, 0
    %p124 = por %p122, %p123
    %p125 = scmp.ne.s32.totalorder %s114, %s117
    %p126 = scmp.eq.s32.totalorder %s15, 1
    %p127 = por %p125, %p126
    %p128 = scmp.ne.s32.totalorder %s117, %s118
    %p129 = scmp.eq.s32.totalorder %s15, 0
    %p130 = por %p128, %p129
    %p131 = scmp.ne.s32.totalorder %s117, %s118
    %p132 = scmp.eq.s32.totalorder %s16, 1
    %p133 = por %p131, %p132
    %p135 = scmp.ne.s32.totalorder %s118, %s134
    %p136 = scmp.eq.s32.totalorder %s16, 0
    %p137 = por %p135, %p136
    %p138 = scmp.le.s32.totalorder 1, %s10
    %p139 = scmp.lt.s32.totalorder %s10, 3
    %p140 = pnand %p138, %p139
    %p141 = pneg %p140
    // Predicated region
    $region9: #{tpu_custom_call.1} parent=5 // pred_check
      _
    $region10: #{tpu_custom_call.1} parent=5 // pred_check_branch
      %143 = sbr.rel (%p140) target = $region12
    $region11: #{tpu_custom_call.1} parent=5 // pred_region
      %s144 = ssub.s32 %s10, 1
      // Predicated region
      $region13: #{tpu_custom_call.1} parent=11 // pred_check
        %p145 = pneg %p83
      $region14: #{tpu_custom_call.1} parent=11 // pred_check_branch
        %147 = sbr.rel (%p145) target = $region16
      $region15: #{tpu_custom_call.1} parent=11 // pred_region
        _
      $region16: #{tpu_custom_call.1} parent=11 // pred_fallthru
        _
      // Predicated region
      $region17: #{tpu_custom_call.1} parent=11 // pred_check
        %p148 = pneg %p104
      $region18: #{tpu_custom_call.1} parent=11 // pred_check_branch
        %150 = sbr.rel (%p148) target = $region20
      $region19: #{tpu_custom_call.1} parent=11 // pred_region
        _
      $region20: #{tpu_custom_call.1} parent=11 // pred_fallthru
        _
    $region12: #{tpu_custom_call.1} parent=5 // pred_fallthru
      _
    %p151 = scmp.lt.s32.totalorder %s10, 2
    // Predicated region
    $region21: #{tpu_custom_call.1} parent=5 // pred_check
      %p152 = pneg %p151
    $region22: #{tpu_custom_call.1} parent=5 // pred_check_branch
      %154 = sbr.rel (%p152) target = $region24
    $region23: #{tpu_custom_call.1} parent=5 // pred_region
      // Predicated region
      $region25: #{tpu_custom_call.1} parent=23 // pred_check
        %p155 = pneg %p30
      $region26: #{tpu_custom_call.1} parent=23 // pred_check_branch
        %157 = sbr.rel (%p155) target = $region28
      $region27: #{tpu_custom_call.1} parent=23 // pred_region
        %s158 = smul.u32 6, %s10
        %p159 = scmp.lt.s32.totalorder %s158, 11
        %s160 = scalar_select %p159, %s158, 11
        %s161 = smul.addr %s160, 8
        %s162 = scalar_lea.vmem %s0, %s161
        %s163 = smul.u32 6, %s10
      $region28: #{tpu_custom_call.1} parent=23 // pred_fallthru
        _
      // Predicated region
      $region29: #{tpu_custom_call.1} parent=23 // pred_check
        %p164 = pneg %p56
      $region30: #{tpu_custom_call.1} parent=23 // pred_check_branch
        %166 = sbr.rel (%p164) target = $region32
      $region31: #{tpu_custom_call.1} parent=23 // pred_region
        %s167 = smul.u32 6, %s10
        %p168 = scmp.lt.s32.totalorder %s167, 11
        %s169 = scalar_select %p168, %s167, 11
        %s170 = smul.addr %s169, 8
        %s171 = scalar_lea.vmem %s1, %s170
        %s172 = smul.u32 6, %s10
      $region32: #{tpu_custom_call.1} parent=23 // pred_fallthru
        _
    $region24: #{tpu_custom_call.1} parent=5 // pred_fallthru
      _
    %p173 = scmp.le.s32.totalorder 1, %s10
    %p174 = scmp.lt.s32.totalorder %s10, 3
    %p175 = pnand %p173, %p174
    %p176 = pneg %p175
    // Predicated region
    $region33: #{tpu_custom_call.1} parent=5 // pred_check
      _
    $region34: #{tpu_custom_call.1} parent=5 // pred_check_branch
      %178 = sbr.rel (%p175) target = $region36
    $region35: #{tpu_custom_call.1} parent=5 // pred_region
      %s179 = ssub.s32 %s10, 1
      %s180 = smul.u32 6, %s15
      %p181 = scmp.lt.s32.totalorder %s180, 11
      %s182 = scalar_select %p181, %s180, 11
      %s183 = smul.addr %s182, 8
      %s184 = scalar_lea.vmem %s0, %s183
      %p185 = pneg %p36
      %p186 = pneg %p33
      %s187 = smul.u32 6, %s15
      %p188 = scmp.lt.s32.totalorder %s187, 11
      %s189 = scalar_select %p188, %s187, 11
      %s190 = smul.addr %s189, 8
      %s191 = scalar_lea.vmem %s1, %s190
      %p192 = pneg %p62
      %p193 = pneg %p59
      %p194 = pneg %p83
      %p195 = pneg %p80
      %p196 = pneg %p104
      %p197 = pneg %p101
      %p198 = pneg %p130
      %p199 = pneg %p127
      %s200 = smul.u32 6, %s15
      %p201 = scmp.lt.s32.totalorder %s200, 11
      %s202 = scalar_select %p201, %s200, 11
      %s203 = smul.addr %s202, 8
      %s204 = scalar_lea.vmem %s4, %s203
      %s205 = smul.u32 6, %s15
      %p206 = scmp.lt.s32.totalorder %s205, 11
      %s207 = scalar_select %p206, %s205, 11
      %s208 = smul.addr %s207, 8
      %s209 = scalar_lea.vmem %s0, %s208
      %s210 = smul.u32 6, %s15
      %s211 = smul.u32 6, %s15
      %p212 = scmp.lt.s32.totalorder %s211, 11
      %s213 = scalar_select %p212, %s211, 11
      %s214 = smul.addr %s213, 8
      %s215 = scalar_lea.vmem %s1, %s214
      %s216 = smul.u32 6, %s15
      %s217 = smul.u32 6, %s15
      %p218 = scmp.lt.s32.totalorder %s217, 11
      %s219 = scalar_select %p218, %s217, 11
      %s220 = smul.addr %s219, 8
      %s221 = scalar_lea.vmem %s4, %s220
      %s222 = smul.u32 6, %s15
      %v223 = vlaneseq
      %v224 = vand.u32 %v223, 127
      %v225 = vld [vmem:[%s209] sm:$0xff]
      %v226 = vld [vmem:[%s209 + $0x8] sm:$0xff]
      %v227 = vld [vmem:[%s209 + $0x10] sm:$0xff]
      %v228 = vld [vmem:[%s209 + $0x18] sm:$0xff]
      %v229 = vld [vmem:[%s209 + $0x20] sm:$0xff]
      %v230 = vld [vmem:[%s209 + $0x28] sm:$0xff]
      %231 = vset.pattern.permute.xlu0 0
      %232 = vperm.xlu0 %231, %v225
      %v233 = vpop.permute.xlu0 %232
      %234 = vset.pattern.permute.xlu0 0
      %235 = vperm.xlu0 %234, %v226
      %v236 = vpop.permute.xlu0 %235
      %237 = vset.pattern.permute.xlu0 0
      %238 = vperm.xlu0 %237, %v227
      %v239 = vpop.permute.xlu0 %238
      %240 = vset.pattern.permute.xlu0 0
      %241 = vperm.xlu0 %240, %v228
      %v242 = vpop.permute.xlu0 %241
      %243 = vset.pattern.permute.xlu0 0
      %244 = vperm.xlu0 %243, %v229
      %v245 = vpop.permute.xlu0 %244
      %246 = vset.pattern.permute.xlu0 0
      %247 = vperm.xlu0 %246, %v230
      %v248 = vpop.permute.xlu0 %247
      %vm249 = vcmp.eq.s32.totalorder %v233, %v224
      %vm250 = vcmp.eq.s32.totalorder %v236, %v224
      %vm251 = vcmp.eq.s32.totalorder %v239, %v224
      %vm252 = vcmp.eq.s32.totalorder %v242, %v224
      %vm253 = vcmp.eq.s32.totalorder %v245, %v224
      %vm254 = vcmp.eq.s32.totalorder %v248, %v224
      %v255 = vsel %vm249, 1, 0
      %v256 = vsel %vm250, 1, 0
      %v257 = vsel %vm251, 1, 0
      %v258 = vsel %vm252, 1, 0
      %v259 = vsel %vm253, 1, 0
      %v260 = vsel %vm254, 1, 0
      %v261 = vcvt.s32.f32 %v255
      %v262 = vcvt.s32.f32 %v256
      %v263 = vcvt.s32.f32 %v257
      %v264 = vcvt.s32.f32 %v258
      %v265 = vcvt.s32.f32 %v259
      %v266 = vcvt.s32.f32 %v260
      %v267 = vld [vmem:[%s215] sm:$0xff]
      %v268 = vld [vmem:[%s215 + $0x8] sm:$0xff]
      %v269 = vld [vmem:[%s215 + $0x10] sm:$0xff]
      %v270 = vld [vmem:[%s215 + $0x18] sm:$0xff]
      %v271 = vld [vmem:[%s215 + $0x20] sm:$0xff]
      %v272 = vld [vmem:[%s215 + $0x28] sm:$0xff]
      %273 = vset.pattern.permute.xlu0 0
      %274 = vperm.xlu0 %273, %v267
      %v275 = vpop.permute.xlu0 %274
      %276 = vset.pattern.permute.xlu0 0
      %277 = vperm.xlu0 %276, %v268
      %v278 = vpop.permute.xlu0 %277
      %279 = vset.pattern.permute.xlu0 0
      %280 = vperm.xlu0 %279, %v269
      %v281 = vpop.permute.xlu0 %280
      %282 = vset.pattern.permute.xlu0 0
      %283 = vperm.xlu0 %282, %v270
      %v284 = vpop.permute.xlu0 %283
      %285 = vset.pattern.permute.xlu0 0
      %286 = vperm.xlu0 %285, %v271
      %v287 = vpop.permute.xlu0 %286
      %288 = vset.pattern.permute.xlu0 0
      %289 = vperm.xlu0 %288, %v272
      %v290 = vpop.permute.xlu0 %289
      %vm291 = vcmp.eq.s32.totalorder %v275, %v224
      %vm292 = vcmp.eq.s32.totalorder %v278, %v224
      %vm293 = vcmp.eq.s32.totalorder %v281, %v224
      %vm294 = vcmp.eq.s32.totalorder %v284, %v224
      %vm295 = vcmp.eq.s32.totalorder %v287, %v224
      %vm296 = vcmp.eq.s32.totalorder %v290, %v224
      %v297 = vsel %vm291, 1, 0
      %v298 = vsel %vm292, 1, 0
      %v299 = vsel %vm293, 1, 0
      %v300 = vsel %vm294, 1, 0
      %v301 = vsel %vm295, 1, 0
      %v302 = vsel %vm296, 1, 0
      %v303 = vcvt.s32.f32 %v297
      %v304 = vcvt.s32.f32 %v298
      %v305 = vcvt.s32.f32 %v299
      %v306 = vcvt.s32.f32 %v300
      %v307 = vcvt.s32.f32 %v301
      %v308 = vcvt.s32.f32 %v302
      %v309 = vld [vmem:[%s2] sm:$0xff]
      %v310 = vld [vmem:[%s2 + $0x8] sm:$0xff]
      %v311 = vld [vmem:[%s2 + $0x10] sm:$0xff]
      %v312 = vld [vmem:[%s2 + $0x18] sm:$0xff]
      %v313 = vld [vmem:[%s2 + $0x20] sm:$0xff]
      %v314 = vld [vmem:[%s2 + $0x28] sm:$0xff]
      %v315 = vld [vmem:[%s2 + $0x30] sm:$0xff]
      %v316 = vld [vmem:[%s2 + $0x38] sm:$0xff]
      %vm317 = vcmask 523264
      %v319 = vsel %vm317, %v261, 0
      %v322 = vsel %vm317, %v262, 0
      %v325 = vsel %vm317, %v263, 0
      %v328 = vsel %vm317, %v264, 0
      %v331 = vsel %vm317, %v265, 0
      %v334 = vsel %vm317, %v266, 0
      %336 = vmatprep.subr.mxu0 0.0
      %337 = vmatpush1.msra.mxu0 0.0
      %338 = vmatprep.subr.mxu0 0.0
      %339 = vmatpush1.msra.mxu0 0.0
      %340 = vmatprep.subr.mxu0 0.0
      %341 = vmatpush1.msra.mxu0 0.0
      %342 = vmatprep.subr.mxu0 0.0
      %343 = vmatpush1.msra.mxu0 0.0
      %344 = vmatprep.subr.mxu0 0.0
      %345 = vmatpush1.msra.mxu0 0.0
      %346 = vmatprep.subr.mxu0 0.0
      %347 = vmatpush1.msra.mxu0 0.0
      %348 = vmatprep.subr.mxu0 0.0
      %349 = vmatpush1.msra.mxu0 0.0
      %350 = vmatprep.subr.mxu0 0.0
      %351 = vmatpush1.msra.mxu0 0.0
      %352 = vmatprep.subr.mxu0 0.0
      %353 = vmatpush1.msra.mxu0 %v316
      %354 = vmatprep.subr.mxu0 0.0
      %355 = vmatpush1.msra.mxu0 %v315
      %356 = vmatprep.subr.mxu0 0.0
      %357 = vmatpush1.msra.mxu0 %v314
      %358 = vmatprep.subr.mxu0 0.0
      %359 = vmatpush1.msra.mxu0 %v313
      %360 = vmatprep.subr.mxu0 0.0
      %361 = vmatpush1.msra.mxu0 %v312
      %362 = vmatprep.subr.mxu0 0.0
      %363 = vmatpush1.msra.mxu0 %v311
      %364 = vmatprep.subr.mxu0 0.0
      %365 = vmatpush1.msra.mxu0 %v310
      %366 = vmatprep.subr.mxu0 0.0
      %367 = vmatpush1.msra.mxu0 %v309
      %368 = vmatprep.subr.mxu0 0.0
      %369 = vmatpush2.msra.mxu0 0.0
      %370 = vmatprep.subr.mxu0 0.0
      %371 = vmatpush2.msra.mxu0 0.0
      %372 = vmatprep.subr.mxu0 0.0
      %373 = vmatpush2.msra.mxu0 0.0
      %374 = vmatprep.subr.mxu0 0.0
      %375 = vmatpush2.msra.mxu0 0.0
      %376 = vmatprep.subr.mxu0 0.0
      %377 = vmatpush2.msra.mxu0 0.0
      %378 = vmatprep.subr.mxu0 0.0
      %379 = vmatpush2.msra.mxu0 0.0
      %380 = vmatprep.subr.mxu0 0.0
      %381 = vmatpush2.msra.mxu0 0.0
      %382 = vmatprep.subr.mxu0 0.0
      %383 = vmatpush2.msra.mxu0 0.0
      %384 = vmatprep.subr.mxu0 0.0
      %385 = vmatpush2.msra.mxu0 0.0
      %386 = vmatprep.subr.mxu0 0.0
      %387 = vmatpush2.msra.mxu0 0.0
      %388 = vmatprep.subr.mxu0 0.0
      %389 = vmatpush2.msra.mxu0 0.0
      %390 = vmatprep.subr.mxu0 0.0
      %391 = vmatpush2.msra.mxu0 0.0
      %392 = vmatprep.subr.mxu0 0.0
      %393 = vmatpush2.msra.mxu0 0.0
      %394 = vmatprep.subr.mxu0 0.0
      %395 = vmatpush2.msra.mxu0 0.0
      %396 = vmatprep.subr.mxu0 0.0
      %397 = vmatpush2.msra.mxu0 0.0
      %398 = vmatprep.subr.mxu0 0.0
      %399 = vmatpush2.msra.mxu0 0.0
      %400 = vmatprep.mubr.f32.mxu0 0.0
      %401 = vmatmul.mubr.f32.gmra.mxu0 %v319
      %v402 = vpop.f32.mrf.mxu0
      %v403 = vadd.f32 0.0, %v402
      %v404 = vpop.f32.mrf.mxu0
      %405 = vmatprep.mubr.f32.mxu0 0.0
      %406 = vmatmul.mubr.f32.gmra.mxu0 %v322
      %v407 = vpop.f32.mrf.mxu0
      %v408 = vadd.f32 0.0, %v407
      %v409 = vpop.f32.mrf.mxu0
      %410 = vmatprep.mubr.f32.mxu0 0.0
      %411 = vmatmul.mubr.f32.gmra.mxu0 %v325
      %v412 = vpop.f32.mrf.mxu0
      %v413 = vadd.f32 0.0, %v412
      %v414 = vpop.f32.mrf.mxu0
      %415 = vmatprep.mubr.f32.mxu0 0.0
      %416 = vmatmul.mubr.f32.gmra.mxu0 %v328
      %v417 = vpop.f32.mrf.mxu0
      %v418 = vadd.f32 0.0, %v417
      %v419 = vpop.f32.mrf.mxu0
      %420 = vmatprep.mubr.f32.mxu0 0.0
      %421 = vmatmul.mubr.f32.gmra.mxu0 %v331
      %v422 = vpop.f32.mrf.mxu0
      %v423 = vadd.f32 0.0, %v422
      %v424 = vpop.f32.mrf.mxu0
      %425 = vmatprep.mubr.f32.mxu0 0.0
      %426 = vmatmul.mubr.f32.gmra.mxu0 %v334
      %v427 = vpop.f32.mrf.mxu0
      %v428 = vadd.f32 0.0, %v427
      %v429 = vpop.f32.mrf.mxu0
      %430 = vdwg.mxu0
      %v431 = vld [vmem:[%s3] sm:$0xff]
      %v432 = vld [vmem:[%s3 + $0x8] sm:$0xff]
      %v433 = vld [vmem:[%s3 + $0x10] sm:$0xff]
      %v434 = vld [vmem:[%s3 + $0x18] sm:$0xff]
      %v435 = vld [vmem:[%s3 + $0x20] sm:$0xff]
      %v436 = vld [vmem:[%s3 + $0x28] sm:$0xff]
      %v437 = vld [vmem:[%s3 + $0x30] sm:$0xff]
      %v438 = vld [vmem:[%s3 + $0x38] sm:$0xff]
      %v440 = vsel %vm317, %v303, 0
      %v443 = vsel %vm317, %v304, 0
      %v446 = vsel %vm317, %v305, 0
      %v449 = vsel %vm317, %v306, 0
      %v452 = vsel %vm317, %v307, 0
      %v455 = vsel %vm317, %v308, 0
      %457 = vmatprep.subr.mxu0 0.0
      %458 = vmatpush1.msra.mxu0 0.0
      %459 = vmatprep.subr.mxu0 0.0
      %460 = vmatpush1.msra.mxu0 0.0
      %461 = vmatprep.subr.mxu0 0.0
      %462 = vmatpush1.msra.mxu0 0.0
      %463 = vmatprep.subr.mxu0 0.0
      %464 = vmatpush1.msra.mxu0 0.0
      %465 = vmatprep.subr.mxu0 0.0
      %466 = vmatpush1.msra.mxu0 0.0
      %467 = vmatprep.subr.mxu0 0.0
      %468 = vmatpush1.msra.mxu0 0.0
      %469 = vmatprep.subr.mxu0 0.0
      %470 = vmatpush1.msra.mxu0 0.0
      %471 = vmatprep.subr.mxu0 0.0
      %472 = vmatpush1.msra.mxu0 0.0
      %473 = vmatprep.subr.mxu0 0.0
      %474 = vmatpush1.msra.mxu0 %v438
      %475 = vmatprep.subr.mxu0 0.0
      %476 = vmatpush1.msra.mxu0 %v437
      %477 = vmatprep.subr.mxu0 0.0
      %478 = vmatpush1.msra.mxu0 %v436
      %479 = vmatprep.subr.mxu0 0.0
      %480 = vmatpush1.msra.mxu0 %v435
      %481 = vmatprep.subr.mxu0 0.0
      %482 = vmatpush1.msra.mxu0 %v434
      %483 = vmatprep.subr.mxu0 0.0
      %484 = vmatpush1.msra.mxu0 %v433
      %485 = vmatprep.subr.mxu0 0.0
      %486 = vmatpush1.msra.mxu0 %v432
      %487 = vmatprep.subr.mxu0 0.0
      %488 = vmatpush1.msra.mxu0 %v431
      %489 = vmatprep.subr.mxu0 0.0
      %490 = vmatpush2.msra.mxu0 0.0
      %491 = vmatprep.subr.mxu0 0.0
      %492 = vmatpush2.msra.mxu0 0.0
      %493 = vmatprep.subr.mxu0 0.0
      %494 = vmatpush2.msra.mxu0 0.0
      %495 = vmatprep.subr.mxu0 0.0
      %496 = vmatpush2.msra.mxu0 0.0
      %497 = vmatprep.subr.mxu0 0.0
      %498 = vmatpush2.msra.mxu0 0.0
      %499 = vmatprep.subr.mxu0 0.0
      %500 = vmatpush2.msra.mxu0 0.0
      %501 = vmatprep.subr.mxu0 0.0
      %502 = vmatpush2.msra.mxu0 0.0
      %503 = vmatprep.subr.mxu0 0.0
      %504 = vmatpush2.msra.mxu0 0.0
      %505 = vmatprep.subr.mxu0 0.0
      %506 = vmatpush2.msra.mxu0 0.0
      %507 = vmatprep.subr.mxu0 0.0
      %508 = vmatpush2.msra.mxu0 0.0
      %509 = vmatprep.subr.mxu0 0.0
      %510 = vmatpush2.msra.mxu0 0.0
      %511 = vmatprep.subr.mxu0 0.0
      %512 = vmatpush2.msra.mxu0 0.0
      %513 = vmatprep.subr.mxu0 0.0
      %514 = vmatpush2.msra.mxu0 0.0
      %515 = vmatprep.subr.mxu0 0.0
      %516 = vmatpush2.msra.mxu0 0.0
      %517 = vmatprep.subr.mxu0 0.0
      %518 = vmatpush2.msra.mxu0 0.0
      %519 = vmatprep.subr.mxu0 0.0
      %520 = vmatpush2.msra.mxu0 0.0
      %521 = vmatprep.mubr.f32.mxu0 0.0
      %522 = vmatmul.mubr.f32.gmra.mxu0 %v440
      %v523 = vpop.f32.mrf.mxu0
      %v524 = vadd.f32 0.0, %v523
      %v525 = vpop.f32.mrf.mxu0
      %526 = vmatprep.mubr.f32.mxu0 0.0
      %527 = vmatmul.mubr.f32.gmra.mxu0 %v443
      %v528 = vpop.f32.mrf.mxu0
      %v529 = vadd.f32 0.0, %v528
      %v530 = vpop.f32.mrf.mxu0
      %531 = vmatprep.mubr.f32.mxu0 0.0
      %532 = vmatmul.mubr.f32.gmra.mxu0 %v446
      %v533 = vpop.f32.mrf.mxu0
      %v534 = vadd.f32 0.0, %v533
      %v535 = vpop.f32.mrf.mxu0
      %536 = vmatprep.mubr.f32.mxu0 0.0
      %537 = vmatmul.mubr.f32.gmra.mxu0 %v449
      %v538 = vpop.f32.mrf.mxu0
      %v539 = vadd.f32 0.0, %v538
      %v540 = vpop.f32.mrf.mxu0
      %541 = vmatprep.mubr.f32.mxu0 0.0
      %542 = vmatmul.mubr.f32.gmra.mxu0 %v452
      %v543 = vpop.f32.mrf.mxu0
      %v544 = vadd.f32 0.0, %v543
      %v545 = vpop.f32.mrf.mxu0
      %546 = vmatprep.mubr.f32.mxu0 0.0
      %547 = vmatmul.mubr.f32.gmra.mxu0 %v455
      %v548 = vpop.f32.mrf.mxu0
      %v549 = vadd.f32 0.0, %v548
      %v550 = vpop.f32.mrf.mxu0
      %551 = vdwg.mxu0
      %v552 = vmul.f32 %v403, %v524
      %v553 = vmul.f32 %v408, %v529
      %v554 = vmul.f32 %v413, %v534
      %v555 = vmul.f32 %v418, %v539
      %v556 = vmul.f32 %v423, %v544
      %v557 = vmul.f32 %v428, %v549
      %vm558 = vcmask 261120
      %v559 = vsel %vm558, %v552, 0.0
      %560 = vadd.xlane.f32.xlu0 %v559
      %v561 = vpop.xlane.xlu0 %560
      %v562 = vsel %vm558, %v553, 0.0
      %563 = vadd.xlane.f32.xlu0 %v562
      %v564 = vpop.xlane.xlu0 %563
      %v565 = vsel %vm558, %v554, 0.0
      %566 = vadd.xlane.f32.xlu0 %v565
      %v567 = vpop.xlane.xlu0 %566
      %v568 = vsel %vm558, %v555, 0.0
      %569 = vadd.xlane.f32.xlu0 %v568
      %v570 = vpop.xlane.xlu0 %569
      %v571 = vsel %vm558, %v556, 0.0
      %572 = vadd.xlane.f32.xlu0 %v571
      %v573 = vpop.xlane.xlu0 %572
      %v574 = vsel %vm558, %v557, 0.0
      %575 = vadd.xlane.f32.xlu0 %v574
      %v576 = vpop.xlane.xlu0 %575
      %vm577 = vcmask 7168
      %578 = vst.msk [vmem:[%s221] sm:$0xff] %vm577, %v561
      %579 = vst.msk [vmem:[%s221 + $0x8] sm:$0xff] %vm577, %v564
      %580 = vst.msk [vmem:[%s221 + $0x10] sm:$0xff] %vm577, %v567
      %581 = vst.msk [vmem:[%s221 + $0x18] sm:$0xff] %vm577, %v570
      %582 = vst.msk [vmem:[%s221 + $0x20] sm:$0xff] %vm577, %v573
      %583 = vst.msk [vmem:[%s221 + $0x28] sm:$0xff] %vm577, %v576
      %s584 = smul.u32 6, %s15
      %p585 = scmp.lt.s32.totalorder %s584, 11
      %s586 = scalar_select %p585, %s584, 11
      %s587 = smul.addr %s586, 8
      %s588 = scalar_lea.vmem %s4, %s587
      // Predicated region
      $region37: #{tpu_custom_call.1} parent=35 // pred_check
        %p589 = pneg %p127
      $region38: #{tpu_custom_call.1} parent=35 // pred_check_branch
        %591 = sbr.rel (%p589) target = $region40
      $region39: #{tpu_custom_call.1} parent=35 // pred_region
        %s592 = smul.u32 6, %s15
      $region40: #{tpu_custom_call.1} parent=35 // pred_fallthru
        _
    $region36: #{tpu_custom_call.1} parent=5 // pred_fallthru
      _
    %p593 = scmp.le.s32.totalorder 2, %s10
    // Predicated region
    $region41: #{tpu_custom_call.1} parent=5 // pred_check
      %p594 = pneg %p593
    $region42: #{tpu_custom_call.1} parent=5 // pred_check_branch
      %596 = sbr.rel (%p594) target = $region44
    $region43: #{tpu_custom_call.1} parent=5 // pred_region
      %s597 = ssub.s32 %s10, 2
      // Predicated region
      $region45: #{tpu_custom_call.1} parent=43 // pred_check
        %p598 = pneg %p133
      $region46: #{tpu_custom_call.1} parent=43 // pred_check_branch
        %600 = sbr.rel (%p598) target = $region48
      $region47: #{tpu_custom_call.1} parent=43 // pred_region
        %s601 = smul.u32 6, %s16
        %p602 = scmp.lt.s32.totalorder %s601, 11
        %s603 = scalar_select %p602, %s601, 11
        %s604 = smul.addr %s603, 8
        %s605 = scalar_lea.vmem %s4, %s604
      $region48: #{tpu_custom_call.1} parent=43 // pred_fallthru
        _
    $region44: #{tpu_custom_call.1} parent=5 // pred_fallthru
      _
  $region6: #{tpu_custom_call.1} parent=0 // loop_footer
    %s14 = sadd.s32 1, %s10
  $region7: #{tpu_custom_call.1} parent=0 // loop_footer_branch
    %9 = sbr.rel target = $region3
  $region8: #{tpu_custom_call.1} parent=0 // loop_exit
    _

</llo_original>
